<compile_context>
chip_gen: v7x
topology: tpu7x:2x2x1
jax: 0.10.0
libtpu: 0.0.40
codegen_flags: <defaults>
</compile_context>

<pallas_src>
import functools

import jax
import jax.numpy as jnp
from jax.experimental import pallas as pl
from jax.experimental.pallas import tpu as pltpu


def _round_up(v, m):
    return ((v + m - 1) // m) * m


def _round_down(v, m):
    return max((v // m) * m, m)


def _sublane_multiple(dtype):
    # Native sublane packing: 8 rows for 4-byte, 16 for 2-byte, 32 for 1-byte.
    return max(8, 32 // jnp.dtype(dtype).itemsize)


def _vmem_capacity_bytes():
    # Physical VMEM per TensorCore: 128 MiB on v5e/v6e, 64 MiB on v7x.
    try:
        cap = int(pltpu.get_tpu_info().vmem_capacity_bytes)
        if cap > 0:
            return cap
    except Exception:
        pass
    return 64 << 20  # conservative fallback (v7x-sized)


def _supports_narrow_vpu():
    # v6e/v7x have bf16 VALUs; v5e and older widen bf16 anyway (extra
    # pack/unpack), so the narrow elementwise path only pays off on v6e+.
    try:
        kind = jax.devices()[0].device_kind.lower()
    except Exception:
        return True
    return not any(v in kind for v in ("v2", "v3", "v4", "v5"))


def _layernorm_kernel(x_ref, w_ref, b_ref, o_ref, *, eps, compute_dtype):
    """One (TM, H) tile of rows; w_ref/b_ref are (1, H); o_ref is (TM, H).

    NOTE: the last grid step may overhang past the real row count; those rows
    hold unspecified data but only feed their own (discarded) per-row stats
    and their OOB writes are dropped. Do not add cross-row work here without
    reinstating masking.
    """
    x = x_ref[...]
    xf = x.astype(jnp.float32)
    inv_h = jnp.float32(1.0 / x.shape[-1])

    # Single pass over the tile: sum(x) and sum(x^2) together, f32 accumulation.
    s1 = jnp.sum(xf, axis=-1, keepdims=True)
    s2 = jnp.sum(xf * xf, axis=-1, keepdims=True)
    u = s1 * inv_h
    # Biased variance via E[x^2] - E[x]^2; clamp the tiny negatives the
    # one-pass form can produce for near-constant rows.
    var = jnp.maximum(s2 * inv_h - u * u, 0.0)
    a = jax.lax.rsqrt(var + eps)     # EUP slot (free relative to VALU)
    c = -u * a                       # per-row shift so y = x * a + c

    if compute_dtype == jnp.float32:
        y = xf * a + c
        o_ref[...] = (y * w_ref[...].astype(jnp.float32)
                      + b_ref[...].astype(jnp.float32)).astype(o_ref.dtype)
    else:
        # Narrow wide-path (v6e/v7x): only the (TM, 1) statistics stay f32.
        cd = compute_dtype
        y = x.astype(cd) * a.astype(cd) + c.astype(cd)
        o_ref[...] = (y * w_ref[...].astype(cd)
                      + b_ref[...].astype(cd)).astype(o_ref.dtype)


def layer_norm(x, weight, bias, eps=1e-12):
    """x: (..., hidden). weight, bias: (hidden,). Returns x's shape/dtype."""
    orig_shape = x.shape
    hidden = orig_shape[-1]
    x2 = x.reshape(-1, hidden)
    rows = x2.shape[0]

    in_bytes = jnp.dtype(x.dtype).itemsize
    row_bytes = hidden * in_bytes
    sub = _sublane_multiple(x.dtype)

    # ---- generation-aware VMEM budget ------------------------------------
    vmem_cap = _vmem_capacity_bytes()
    vmem_ceiling = (vmem_cap // 4) * 3     # 75%: ~48 MiB on v7x, ~96 MiB on v5e/v6e

    # Per-row VMEM cost of a grid step: double-buffered input + output tiles
    # plus ~2 f32 rows of working set for the stats/normalize pass.
    bytes_per_row = 2 * row_bytes + 2 * row_bytes + 2 * hidden * 4
    fixed_bytes = (4 << 20) + 4 * hidden * 4     # slack + resident (1,H) weight/bias
    budget = max(vmem_ceiling - fixed_bytes, bytes_per_row * sub)
    tm_vmem = _round_down(budget // bytes_per_row, sub)

    # ---- target tile: ~2 MiB on 64 MiB parts, ~4 MiB on 128 MiB parts ----
    target_bytes = (4 << 20) if vmem_cap >= (96 << 20) else (2 << 20)
    tm = _round_down(max(target_bytes // max(row_bytes, 1), sub), sub)
    tm = min(tm, tm_vmem, 1 << 15)

    # ---- keep >= ~8 grid steps (>= 4 per v7x TensorCore) so double
    # buffering has DMA/compute to overlap, without dropping tiles below ~1 MiB.
    tm_1mib = _round_down(max((1 << 20) // max(row_bytes, 1), sub), sub)
    tm_steps = _round_up(pl.cdiv(rows, 8), sub)
    tm = min(tm, max(tm_steps, min(tm_1mib, tm_vmem)))

    # Never exceed the sublane-rounded row count; keep >= one sublane group.
    tm = max(min(tm, _round_up(rows, sub)), sub)

    grid = (pl.cdiv(rows, tm),)   # no host-side padding; partial last block is OK

    # Actual request, clamped under the generation-aware ceiling.
    vmem_need = tm * bytes_per_row + fixed_bytes
    vmem_limit = int(min(max(vmem_need, 32 << 20), vmem_ceiling))

    if jnp.dtype(x.dtype) == jnp.dtype(jnp.float32) or not _supports_narrow_vpu():
        compute_dtype = jnp.float32
    else:
        compute_dtype = x.dtype

    w2 = weight.reshape(1, hidden)
    b2 = bias.reshape(1, hidden)

    kernel = functools.partial(_layernorm_kernel, eps=eps, compute_dtype=compute_dtype)

    out = pl.pallas_call(
        kernel,
        out_shape=jax.ShapeDtypeStruct((rows, hidden), x.dtype),
        grid_spec=pltpu.PrefetchScalarGridSpec(
            num_scalar_prefetch=0,
            grid=grid,
            in_specs=[
                # NOTE: pipeline_mode=pl.Buffered(3) on x/out is a possible
                # low-single-digit win if xprof shows exposed DMA; left at the
                # default depth to keep VMEM pressure low on v7x.
                pl.BlockSpec((tm, hidden), lambda i: (i, 0)),
                pl.BlockSpec((1, hidden), lambda i: (0, 0)),
                pl.BlockSpec((1, hidden), lambda i: (0, 0)),
            ],
            out_specs=pl.BlockSpec((tm, hidden), lambda i: (i, 0)),
        ),
        compiler_params=pltpu.CompilerParams(
            dimension_semantics=("parallel",),
            vmem_limit_bytes=vmem_limit,
        ),
    )(x2, w2, b2)

    return out.reshape(orig_shape)


def layer_norm_ref(x, weight, bias, eps=1e-12):
    u = jnp.mean(x, axis=-1, keepdims=True)
    s = jnp.mean((x - u) ** 2, axis=-1, keepdims=True)
    return weight * ((x - u) / jnp.sqrt(s + eps)) + bias


if __name__ == "__main__":
    key = jax.random.PRNGKey(0)
    batch, seq, hidden = 2, 8, 32

    # Module init: weight = ones, bias = zeros (TF-style LayerNorm).
    weight = jnp.ones((hidden,), jnp.float32)
    bias = jnp.zeros((hidden,), jnp.float32)
    x = jax.random.normal(key, (batch, seq, hidden), jnp.float32)

    y = layer_norm(x, weight, bias)
    jax.block_until_ready(y)
    y_ref = layer_norm_ref(x, weight, bias)
    assert y.shape == x.shape and y.dtype == x.dtype
    assert float(jnp.max(jnp.abs(y - y_ref))) < 1e-5

    # Lane-dense width (realistic transformer case) with a non-trivial affine.
    k1, k2, k3 = jax.random.split(jax.random.PRNGKey(1), 3)
    hidden2 = 128
    w2 = 1.0 + 0.1 * jax.random.normal(k1, (hidden2,), jnp.float32)
    b2 = 0.1 * jax.random.normal(k2, (hidden2,), jnp.float32)
    x2 = jax.random.normal(k3, (batch, seq, hidden2), jnp.float32)
    y2 = layer_norm(x2, w2, b2)
    jax.block_until_ready(y2)
    assert float(jnp.max(jnp.abs(y2 - layer_norm_ref(x2, w2, b2)))) < 1e-5

    # bf16 activations: narrow wide-path on v6e/v7x, f32 path on v5e and older.
    xb = x2.astype(jnp.bfloat16)
    yb = layer_norm(xb, w2, b2)
    jax.block_until_ready(yb)
    ref_b = layer_norm_ref(xb.astype(jnp.float32), w2, b2)
    assert yb.dtype == jnp.bfloat16
    assert float(jnp.max(jnp.abs(yb.astype(jnp.float32) - ref_b))) < 6e-2

    print("KERNEL_OK")
</pallas_src>

<mosaic_0001>
module attributes {stable_mosaic.version = 11 : i64} {
  func.func @_layernorm_kernel(%arg0: i32, %arg1: memref<16x32xf32, #tpu.memory_space<vmem>>, %arg2: memref<1x32xf32, #tpu.memory_space<vmem>>, %arg3: memref<1x32xf32, #tpu.memory_space<vmem>>, %arg4: memref<16x32xf32, #tpu.memory_space<vmem>>) attributes {dimension_semantics = [#tpu.dimension_semantics<parallel>], iteration_bounds = array<i64: 1>, scalar_prefetch = 0 : i64, scratch_operands = 0 : i64, tpu.core_type = #tpu.core_type<tc>, window_params = [{transform_indices = @transform_0, window_bounds = array<i64: 16, 32>}, {pipeline_mode = #tpu.pipeline_mode<synchronous>, transform_indices = @transform_1, window_bounds = array<i64: 1, 32>}, {pipeline_mode = #tpu.pipeline_mode<synchronous>, transform_indices = @transform_2, window_bounds = array<i64: 1, 32>}, {transform_indices = @transform_3, window_bounds = array<i64: 16, 32>}]} {
    %c0 = arith.constant 0 : index
    %c0_0 = arith.constant 0 : index
    %0 = vector.load %arg1[%c0, %c0_0] : memref<16x32xf32, #tpu.memory_space<vmem>>, vector<16x32xf32>
    %cst = arith.constant dense<0.000000e+00> : vector<16xf32>
    %1 = vector.multi_reduction <add>, %0, %cst [1] : vector<16x32xf32> to vector<16xf32>
    %2 = vector.shape_cast %1 : vector<16xf32> to vector<16x1xf32>
    %3 = arith.mulf %0, %0 : vector<16x32xf32>
    %cst_1 = arith.constant dense<0.000000e+00> : vector<16xf32>
    %4 = vector.multi_reduction <add>, %3, %cst_1 [1] : vector<16x32xf32> to vector<16xf32>
    %5 = vector.shape_cast %4 : vector<16xf32> to vector<16x1xf32>
    %cst_2 = arith.constant 3.125000e-02 : f32
    %6 = vector.broadcast %cst_2 : f32 to vector<16x1xf32>
    %7 = arith.mulf %2, %6 : vector<16x1xf32>
    %cst_3 = arith.constant 3.125000e-02 : f32
    %8 = vector.broadcast %cst_3 : f32 to vector<16x1xf32>
    %9 = arith.mulf %5, %8 : vector<16x1xf32>
    %10 = arith.mulf %7, %7 : vector<16x1xf32>
    %11 = arith.subf %9, %10 : vector<16x1xf32>
    %cst_4 = arith.constant 0.000000e+00 : f32
    %12 = vector.broadcast %cst_4 : f32 to vector<16x1xf32>
    %13 = arith.maximumf %11, %12 : vector<16x1xf32>
    %cst_5 = arith.constant 9.99999996E-13 : f32
    %14 = vector.broadcast %cst_5 : f32 to vector<16x1xf32>
    %15 = arith.addf %13, %14 : vector<16x1xf32>
    %16 = math.rsqrt %15 : vector<16x1xf32>
    %cst_6 = arith.constant 0.000000e+00 : f32
    %17 = vector.broadcast %cst_6 : f32 to vector<16x1xf32>
    %18 = arith.subf %17, %7 : vector<16x1xf32>
    %19 = arith.mulf %18, %16 : vector<16x1xf32>
    %20 = vector.broadcast %16 : vector<16x1xf32> to vector<16x32xf32>
    %21 = arith.mulf %0, %20 : vector<16x32xf32>
    %22 = vector.broadcast %19 : vector<16x1xf32> to vector<16x32xf32>
    %23 = arith.addf %21, %22 : vector<16x32xf32>
    %c0_7 = arith.constant 0 : index
    %c0_8 = arith.constant 0 : index
    %24 = vector.load %arg2[%c0_7, %c0_8] : memref<1x32xf32, #tpu.memory_space<vmem>>, vector<1x32xf32>
    %25 = vector.broadcast %24 : vector<1x32xf32> to vector<16x32xf32>
    %26 = arith.mulf %23, %25 : vector<16x32xf32>
    %c0_9 = arith.constant 0 : index
    %c0_10 = arith.constant 0 : index
    %27 = vector.load %arg3[%c0_9, %c0_10] : memref<1x32xf32, #tpu.memory_space<vmem>>, vector<1x32xf32>
    %28 = vector.broadcast %27 : vector<1x32xf32> to vector<16x32xf32>
    %29 = arith.addf %26, %28 : vector<16x32xf32>
    %c0_11 = arith.constant 0 : index
    %c0_12 = arith.constant 0 : index
    %30 = vector.load %arg4[%c0_11, %c0_12] : memref<16x32xf32, #tpu.memory_space<vmem>>, vector<16x32xf32>
    tpu.vector_store %arg4[%c0_11, %c0_12], %29 {strides = array<i32>} : memref<16x32xf32, #tpu.memory_space<vmem>>, vector<16x32xf32>,
    return
  }
  func.func @transform_0(%arg0: i32) -> (i32, i32) {
    %c0_i32 = arith.constant 0 : i32
    %c0_i32_0 = arith.constant 0 : i32
    return %arg0, %c0_i32 : i32, i32
  }
  func.func @transform_1(%arg0: i32) -> (i32, i32) {
    %c0_i32 = arith.constant 0 : i32
    %c0_i32_0 = arith.constant 0 : i32
    %c0_i32_1 = arith.constant 0 : i32
    return %c0_i32, %c0_i32_0 : i32, i32
  }
  func.func @transform_2(%arg0: i32) -> (i32, i32) {
    %c0_i32 = arith.constant 0 : i32
    %c0_i32_0 = arith.constant 0 : i32
    %c0_i32_1 = arith.constant 0 : i32
    return %c0_i32, %c0_i32_0 : i32, i32
  }
  func.func @transform_3(%arg0: i32) -> (i32, i32) {
    %c0_i32 = arith.constant 0 : i32
    %c0_i32_0 = arith.constant 0 : i32
    return %arg0, %c0_i32 : i32, i32
  }
}

</mosaic_0001>

<llo_original>
// kernel: tpu_custom_call.1
$region0: #{tpu_custom_call.1}
  #allocation0 [shape = 'u32[]', space=smem, size = 0x4, offset = 0x4, fixed_abs, tag = 'smem constant byte address 0x4 - core index']
  #allocation1 [shape = 'u32[144,128]{1,0:T(1,128)}', space=vmem, size = 0x12000, scoped, tag = 'internal scratch']
  %s0 = inlined_call_operand.hbm [shape: f32[16,32], index: 0, kind: input, shape index: {}]
  %s1 = inlined_call_operand.vmem [shape: f32[1,32], index: 1, kind: input, shape index: {}]
  %s2 = inlined_call_operand.vmem [shape: f32[1,32], index: 2, kind: input, shape index: {}]
  %s3 = inlined_call_operand.hbm [shape: f32[16,32], index: 3, kind: output, shape index: {}]
  %s4 = sld [smem:[#allocation0]]
  $region26: #{tpu_custom_call.1} parent=0
    _
  %s6 = ssub.s32 1, %s4
  %s7 = scalar_select 0, %s6, %s4
  $region1: #{tpu_custom_call.1} parent=0
    #allocation2 [shape = 'u8[8192]{0}', space=vmem, size = 0x2000, scoped, tag = 'input window, operand 0, single buffered']
    #allocation3 [shape = 's32[1]{0}', space=sflag, size = 0x4, scoped, tag = 'scoped memory for tpu_custom_call.1']
    #allocation4 [shape = 's32[1]{0}', space=sflag, size = 0x4, scoped, tag = 'scoped memory for tpu_custom_call.1']
    #allocation5 [shape = 'u8[8192]{0}', space=vmem, size = 0x2000, scoped, tag = 'output window, operand 0, single buffered']
    %8 = vsyncpa [#allocation3], 0
    %9 = vsyncpa [#allocation4], 0
    // Predicated region
    $region2: #{tpu_custom_call.1} parent=1 // pred_check
      _
    $region3: #{tpu_custom_call.1} parent=1 // pred_check_branch
      %11 = sbr.rel (0) target = $region5
    $region4: #{tpu_custom_call.1} parent=1 // pred_region
      %s13 = ssub.s32 256, 256
      %14 = vsyncadd [#allocation3], %s13
      %s15 = sshll.u32 [#allocation2], 4
      %s16 = int_to_ptr.vmem [resolvable:$true] %s15
      %21 = dma.hbm_to_vmem [thread:$0]  %s0, 256, %s16, [#allocation3], 128, 128, 8
    $region5: #{tpu_custom_call.1} parent=1 // pred_fallthru
      _
    // Predicated region
    $region6: #{tpu_custom_call.1} parent=1 // pred_check
      _
    $region7: #{tpu_custom_call.1} parent=1 // pred_check_branch
      %23 = sbr.rel (0) target = $region9
    $region8: #{tpu_custom_call.1} parent=1 // pred_region
      _
    $region9: #{tpu_custom_call.1} parent=1 // pred_fallthru
      _
    // Predicated region
    $region10: #{tpu_custom_call.1} parent=1 // pred_check
      _
    $region11: #{tpu_custom_call.1} parent=1 // pred_check_branch
      %25 = sbr.rel (0) target = $region13
    $region12: #{tpu_custom_call.1} parent=1 // pred_region
      _
    $region13: #{tpu_custom_call.1} parent=1 // pred_fallthru
      _
    // Predicated region
    $region14: #{tpu_custom_call.1} parent=1 // pred_check
      _
    $region15: #{tpu_custom_call.1} parent=1 // pred_check_branch
      %27 = sbr.rel (0) target = $region17
    $region16: #{tpu_custom_call.1} parent=1 // pred_region
      %28 = dma.done [#allocation3], 256
    $region17: #{tpu_custom_call.1} parent=1 // pred_fallthru
      _
    %v29 = vld [vmem:[#allocation2] sm:$0xff]
    %v30 = vld [vmem:[#allocation2 + $0x8] sm:$0xff]
    %vm31 = vcmask 261120
    %v32 = vsel %vm31, %v29, 0.0
    %33 = vadd.xlane.f32.xlu0 %v32
    %v34 = vpop.xlane.xlu0 %33
    %v35 = vsel %vm31, %v30, 0.0
    %36 = vadd.xlane.f32.xlu0 %v35
    %v37 = vpop.xlane.xlu0 %36
    %v38 = vmul.f32 %v29, %v29
    %v39 = vmul.f32 %v30, %v30
    %v40 = vsel %vm31, %v38, 0.0
    %41 = vadd.xlane.f32.xlu0 %v40
    %v42 = vpop.xlane.xlu0 %41
    %v43 = vsel %vm31, %v39, 0.0
    %44 = vadd.xlane.f32.xlu0 %v43
    %v45 = vpop.xlane.xlu0 %44
    %v46 = vmul.f32 %v34, 0.03125
    %v47 = vmul.f32 %v37, 0.03125
    %v48 = vmul.f32 %v42, 0.03125
    %v49 = vmul.f32 %v45, 0.03125
    %v50 = vmul.f32 %v46, %v46
    %v51 = vmul.f32 %v47, %v47
    %v52 = vsub.f32 %v48, %v50
    %v53 = vsub.f32 %v49, %v51
    %v54 = vmax.f32 %v52, 0.0
    %v55 = vmax.f32 %v53, 0.0
    %v56 = vadd.f32 %v54, 1e-12
    %v57 = vadd.f32 %v55, 1e-12
    %v58 = vrsqrt.pop %v56
    %v59 = vrsqrt.pop %v57
    %v60 = vsub.f32 0.0, %v46
    %v61 = vsub.f32 0.0, %v47
    %v62 = vmul.f32 %v60, %v58
    %v63 = vmul.f32 %v61, %v59
    %v64 = vmul.f32 %v29, %v58
    %v65 = vmul.f32 %v30, %v59
    %v66 = vadd.f32 %v64, %v62
    %v67 = vadd.f32 %v65, %v63
    %v68 = vld [vmem:[%s1] sm:$0x1]
    %v70 = vlaneseq
    %v71 = vshrl.u32 %v70, 7
    %v72 = vsub.s32 0, %v71
    %v73 = vrot.slane %v68, %v72
    %v75 = vmul.f32 %v66, %v73
    %v76 = vmul.f32 %v67, %v73
    %v77 = vld [vmem:[%s2] sm:$0x1]
    %v79 = vlaneseq
    %v80 = vshrl.u32 %v79, 7
    %v81 = vsub.s32 0, %v80
    %v82 = vrot.slane %v77, %v81
    %v84 = vadd.f32 %v75, %v82
    %v85 = vadd.f32 %v76, %v82
    %86 = vst.msk [vmem:[#allocation5] sm:$0xff] %vm31, %v84
    %87 = vst.msk [vmem:[#allocation5 + $0x8] sm:$0xff] %vm31, %v85
    // Predicated region
    $region18: #{tpu_custom_call.1} parent=1 // pred_check
      _
    $region19: #{tpu_custom_call.1} parent=1 // pred_check_branch
      %89 = sbr.rel (0) target = $region21
    $region20: #{tpu_custom_call.1} parent=1 // pred_region
      %s91 = ssub.s32 256, 256
      %92 = vsyncadd [#allocation4], %s91
      %s93 = sshll.u32 [#allocation5], 4
      %s94 = int_to_ptr.vmem [resolvable:$true] %s93
      %99 = dma.vmem_to_hbm [thread:$0]  %s94, 256, %s3, [#allocation4], 128, 128, 8
    $region21: #{tpu_custom_call.1} parent=1 // pred_fallthru
      _
    // Predicated region
    $region22: #{tpu_custom_call.1} parent=1 // pred_check
      _
    $region23: #{tpu_custom_call.1} parent=1 // pred_check_branch
      %101 = sbr.rel (0) target = $region25
    $region24: #{tpu_custom_call.1} parent=1 // pred_region
      %102 = dma.done [#allocation4], 256
    $region25: #{tpu_custom_call.1} parent=1 // pred_fallthru
      _
    %103 = vsyncpa [#allocation3], 1
    %104 = vsyncpa [#allocation4], 1

</llo_original>
